<compile_context>
chip_gen: v6e
topology: v6e:2x2x1
jax: 0.10.0
libtpu: 0.0.40
codegen_flags: <defaults>
</compile_context>

<pallas_src>
import jax
import jax.numpy as jnp
from jax.experimental import pallas as pl
from jax.experimental.pallas import tpu as pltpu


def _make_lsce_kernel(smoothing: float, num_classes: int):
    s = float(smoothing)
    off_w = s / float(num_classes)          # weight on every non-target class
    tgt_w = 1.0 - s                         # extra weight on the target class

    def kernel(x_ref, t_ref, o_ref):
        x = x_ref[...].astype(jnp.float32)                      # (tn, C)
        tgt = t_ref[...]                                        # (tn, 1) int32

        # Cross-lane reductions on the raw tile (XLU); keepdims -> (tn, 1).
        m = jnp.max(x, axis=-1, keepdims=True)                  # (tn, 1)
        sum_x = jnp.sum(x, axis=-1, keepdims=True)              # (tn, 1)

        # exp path only needs the shifted values (EUP).
        sum_e = jnp.sum(jnp.exp(x - m), axis=-1, keepdims=True)  # (tn, 1)

        # Gather x[row, target[row]] via a (1, C) iota broadcast against (tn, 1).
        col = jax.lax.broadcasted_iota(jnp.int32, (1, num_classes), 1)
        x_tgt = jnp.sum(jnp.where(col == tgt, x, 0.0),
                        axis=-1, keepdims=True)                  # (tn, 1)

        # loss = lse - sum_c w_c * x_c   with  sum_c w_c = 1
        o_ref[...] = m + jnp.log(sum_e) - off_w * sum_x - tgt_w * x_tgt

    return kernel


def _choose_tn(n: int, c: int, *, max_tile_f32_bytes: int = 4 << 20) -> int:
    """Row tile: ~4 MiB of f32 per x tile, (8,*)-aligned, >=2 grid tiles if possible."""
    rows = max_tile_f32_bytes // max(1, c * 4)
    rows = max(8, min(8192, (rows // 8) * 8))
    # v7x has 2 TensorCores per chip: make sure the "parallel" grid axis has
    # at least 2 tiles to shard, otherwise one core idles on small batches.
    while rows > 8 and pl.cdiv(n, rows) < 2:
        rows = max(8, ((rows // 2) // 8) * 8)
    return rows


def label_smoothing_cross_entropy(x, target, smoothing: float = 0.1, tn=None):
    """x: [N, C] float (f32 or bf16), target: [N] int.  Returns scalar f32 mean loss."""
    N, C = x.shape

    if tn is None:
        tn = _choose_tn(N, C)
    tn = max(8, (int(tn) // 8) * 8)
    grid_n = pl.cdiv(N, tn)

    t2d = target.astype(jnp.int32).reshape(N, 1)

    losses = pl.pallas_call(
        _make_lsce_kernel(smoothing, C),
        out_shape=jax.ShapeDtypeStruct((N, 1), jnp.float32),
        grid_spec=pltpu.PrefetchScalarGridSpec(
            num_scalar_prefetch=0,
            grid=(grid_n,),
            in_specs=[
                pl.BlockSpec((tn, C), lambda i: (i, 0)),
                pl.BlockSpec((tn, 1), lambda i: (i, 0)),
            ],
            out_specs=pl.BlockSpec((tn, 1), lambda i: (i, 0)),
        ),
        compiler_params=pltpu.CompilerParams(
            # Independent row tiles -> megacore-shardable on v7x.
            dimension_semantics=("parallel",),
            # ~2x double-buffered input + 3-4 full-width f32 temps at the
            # 4 MiB tile budget stays well under this; fits v7x's 64 MiB/TC.
            vmem_limit_bytes=48 * 1024 * 1024,
        ),
    )(x, t2d)

    # Mean over the real rows only; partial-last-block garbage rows are discarded.
    return jnp.mean(losses[:N, 0])


def _reference(x, target, smoothing):
    logprobs = jax.nn.log_softmax(x.astype(jnp.float32), axis=-1)
    nll = -jnp.take_along_axis(logprobs, target[:, None], axis=-1)[:, 0]
    smooth = -jnp.mean(logprobs, axis=-1)
    return jnp.mean((1.0 - smoothing) * nll + smoothing * smooth)


if __name__ == "__main__":
    key = jax.random.PRNGKey(0)
    smoothing = 0.1

    # (N, C, tn_override, dtype): exercises multi-tile, partial last block,
    # explicit small tiles, and bf16 inputs.
    cases = [
        (16, 32, None, jnp.float32),
        (22, 128, None, jnp.float32),
        (44, 32, 8, jnp.float32),
        (40, 64, None, jnp.bfloat16),
    ]

    for N, C, tn, dt in cases:
        kx, kt, key = jax.random.split(key, 3)
        x = jax.random.normal(kx, (N, C), dtype=jnp.float32).astype(dt)
        target = jax.random.randint(kt, (N,), 0, C, dtype=jnp.int32)

        loss = label_smoothing_cross_entropy(x, target, smoothing=smoothing, tn=tn)
        loss = jax.block_until_ready(loss)

        ref = _reference(x.astype(jnp.float32), target, smoothing)
        assert jnp.allclose(loss, ref, atol=1e-5, rtol=1e-5), (N, C, tn, dt, loss, ref)

    print("KERNEL_OK")
</pallas_src>

<mosaic_0001>
module attributes {stable_mosaic.version = 11 : i64} {
  func.func @kernel(%arg0: i32, %arg1: memref<8x32xf32, #tpu.memory_space<vmem>>, %arg2: memref<8x1xi32, #tpu.memory_space<vmem>>, %arg3: memref<8x1xf32, #tpu.memory_space<vmem>>) attributes {dimension_semantics = [#tpu.dimension_semantics<parallel>], iteration_bounds = array<i64: 2>, scalar_prefetch = 0 : i64, scratch_operands = 0 : i64, tpu.core_type = #tpu.core_type<tc>, window_params = [{transform_indices = @transform_0, window_bounds = array<i64: 8, 32>}, {transform_indices = @transform_1, window_bounds = array<i64: 8, 1>}, {transform_indices = @transform_2, window_bounds = array<i64: 8, 1>}]} {
    %c0 = arith.constant 0 : index
    %c0_0 = arith.constant 0 : index
    %0 = vector.load %arg1[%c0, %c0_0] : memref<8x32xf32, #tpu.memory_space<vmem>>, vector<8x32xf32>
    %c0_1 = arith.constant 0 : index
    %c0_2 = arith.constant 0 : index
    %1 = vector.load %arg2[%c0_1, %c0_2] : memref<8x1xi32, #tpu.memory_space<vmem>>, vector<8x1xi32>
    %cst = arith.constant dense<0xFF800000> : vector<8xf32>
    %2 = vector.multi_reduction <maximumf>, %0, %cst [1] : vector<8x32xf32> to vector<8xf32>
    %3 = vector.shape_cast %2 : vector<8xf32> to vector<8x1xf32>
    %cst_3 = arith.constant dense<0.000000e+00> : vector<8xf32>
    %4 = vector.multi_reduction <add>, %0, %cst_3 [1] : vector<8x32xf32> to vector<8xf32>
    %5 = vector.shape_cast %4 : vector<8xf32> to vector<8x1xf32>
    %6 = vector.broadcast %3 : vector<8x1xf32> to vector<8x32xf32>
    %7 = arith.subf %0, %6 : vector<8x32xf32>
    %8 = math.exp %7 : vector<8x32xf32>
    %cst_4 = arith.constant dense<0.000000e+00> : vector<8xf32>
    %9 = vector.multi_reduction <add>, %8, %cst_4 [1] : vector<8x32xf32> to vector<8xf32>
    %10 = vector.shape_cast %9 : vector<8xf32> to vector<8x1xf32>
    %11 = tpu.iota {dimensions = array<i32: 1>} : vector<1x32xi32>
    %12 = vector.broadcast %11 : vector<1x32xi32> to vector<8x32xi32>
    %13 = vector.broadcast %1 : vector<8x1xi32> to vector<8x32xi32>
    %14 = arith.cmpi eq, %12, %13 : vector<8x32xi32>
    %cst_5 = arith.constant 0.000000e+00 : f32
    %15 = vector.broadcast %cst_5 : f32 to vector<8x32xf32>
    %16 = arith.select %14, %0, %15 : vector<8x32xi1>, vector<8x32xf32>
    %cst_6 = arith.constant dense<0.000000e+00> : vector<8xf32>
    %17 = vector.multi_reduction <add>, %16, %cst_6 [1] : vector<8x32xf32> to vector<8xf32>
    %18 = vector.shape_cast %17 : vector<8xf32> to vector<8x1xf32>
    %19 = math.log %10 : vector<8x1xf32>
    %20 = arith.addf %3, %19 : vector<8x1xf32>
    %cst_7 = arith.constant 3.125000e-03 : f32
    %21 = vector.broadcast %cst_7 : f32 to vector<8x1xf32>
    %22 = arith.mulf %21, %5 : vector<8x1xf32>
    %23 = arith.subf %20, %22 : vector<8x1xf32>
    %cst_8 = arith.constant 0.899999976 : f32
    %24 = vector.broadcast %cst_8 : f32 to vector<8x1xf32>
    %25 = arith.mulf %24, %18 : vector<8x1xf32>
    %26 = arith.subf %23, %25 : vector<8x1xf32>
    %c0_9 = arith.constant 0 : index
    %c0_10 = arith.constant 0 : index
    %27 = vector.load %arg3[%c0_9, %c0_10] : memref<8x1xf32, #tpu.memory_space<vmem>>, vector<8x1xf32>
    tpu.vector_store %arg3[%c0_9, %c0_10], %26 {strides = array<i32>} : memref<8x1xf32, #tpu.memory_space<vmem>>, vector<8x1xf32>,
    return
  }
  func.func @transform_0(%arg0: i32) -> (i32, i32) {
    %c0_i32 = arith.constant 0 : i32
    %c0_i32_0 = arith.constant 0 : i32
    return %arg0, %c0_i32 : i32, i32
  }
  func.func @transform_1(%arg0: i32) -> (i32, i32) {
    %c0_i32 = arith.constant 0 : i32
    %c0_i32_0 = arith.constant 0 : i32
    return %arg0, %c0_i32 : i32, i32
  }
  func.func @transform_2(%arg0: i32) -> (i32, i32) {
    %c0_i32 = arith.constant 0 : i32
    %c0_i32_0 = arith.constant 0 : i32
    return %arg0, %c0_i32 : i32, i32
  }
}

</mosaic_0001>

<llo_original>
// kernel: tpu_custom_call.1
$region0: #{tpu_custom_call.1}
  #allocation0 [shape = 'u32[]', space=smem, size = 0x4, offset = 0x4, fixed_abs, tag = 'smem constant byte address 0x4 - core index']
  #allocation1 [shape = 'u32[144,128]{1,0:T(1,128)}', space=vmem, size = 0x12000, scoped, tag = 'internal scratch']
  %s0 = inlined_call_operand.vmem [shape: f32[16,32], index: 0, kind: input, shape index: {}]
  %s1 = inlined_call_operand.vmem [shape: s32[16,1], index: 1, kind: input, shape index: {}]
  %s2 = inlined_call_operand.vmem [shape: f32[16,1], index: 2, kind: output, shape index: {}]
  %s3 = sld [smem:[#allocation0]]
  $region41: #{tpu_custom_call.1} parent=0
    _
  %s5 = ssub.s32 1, %s3
  %s6 = scalar_select 0, %s5, %s3
  loop: start=0, step=1, limit=4
  $region2: #{tpu_custom_call.1} parent=0 // loop_pre_header
    _
  $region3: #{tpu_custom_call.1} parent=0 // loop_header
    %s8 = sphi 0, %s12
    %p9 = scmp.ge.s32.totalorder %s8, 4
    %s18 = sphi 0, %s20
    %s21 = sphi 0, %s18
    %s22 = sphi 0, %s21
    %s38 = sphi 0, %s22
    %s44 = sphi 0, %s46
    %s47 = sphi 0, %s44
    %s48 = sphi 0, %s47
    %s64 = sphi 0, %s48
    %s70 = sphi 0, %s72
    %s73 = sphi 0, %s70
    %s74 = sphi 0, %s73
    %s90 = sphi 0, %s74
  $region4: #{tpu_custom_call.1} parent=0 // loop_header_branch
    %11 = sbr.rel (%p9) target = $region8
  $region5: #{tpu_custom_call.1} parent=0 // loop_body
    %s13 = ssub.s32 %s8, 1
    %s14 = ssub.s32 %s8, 2
    %s15 = sadd.s32 %s8, 1
    %s16 = ssub.s32 %s8, %s15
    %p17 = scmp.eq.s32.totalorder %s16, 0
    %s19 = sadd.s32 %s18, 1
    %s20 = scalar_select %p17, %s18, %s19
    %p23 = pneg %p17
    %p24 = scmp.eq.s32.totalorder %s8, 1
    %p25 = por %p23, %p24
    %p26 = scmp.ne.s32.totalorder %s18, %s21
    %p27 = scmp.eq.s32.totalorder %s8, 0
    %p28 = por %p26, %p27
    %p29 = scmp.ne.s32.totalorder %s18, %s21
    %p30 = scmp.eq.s32.totalorder %s13, 1
    %p31 = por %p29, %p30
    %p32 = scmp.ne.s32.totalorder %s21, %s22
    %p33 = scmp.eq.s32.totalorder %s13, 0
    %p34 = por %p32, %p33
    %p35 = scmp.ne.s32.totalorder %s21, %s22
    %p36 = scmp.eq.s32.totalorder %s14, 1
    %p37 = por %p35, %p36
    %p39 = scmp.ne.s32.totalorder %s22, %s38
    %p40 = scmp.eq.s32.totalorder %s14, 0
    %p41 = por %p39, %p40
    %s42 = ssub.s32 %s8, %s15
    %p43 = scmp.eq.s32.totalorder %s42, 0
    %s45 = sadd.s32 %s44, 1
    %s46 = scalar_select %p43, %s44, %s45
    %p49 = pneg %p43
    %p50 = scmp.eq.s32.totalorder %s8, 1
    %p51 = por %p49, %p50
    %p52 = scmp.ne.s32.totalorder %s44, %s47
    %p53 = scmp.eq.s32.totalorder %s8, 0
    %p54 = por %p52, %p53
    %p55 = scmp.ne.s32.totalorder %s44, %s47
    %p56 = scmp.eq.s32.totalorder %s13, 1
    %p57 = por %p55, %p56
    %p58 = scmp.ne.s32.totalorder %s47, %s48
    %p59 = scmp.eq.s32.totalorder %s13, 0
    %p60 = por %p58, %p59
    %p61 = scmp.ne.s32.totalorder %s47, %s48
    %p62 = scmp.eq.s32.totalorder %s14, 1
    %p63 = por %p61, %p62
    %p65 = scmp.ne.s32.totalorder %s48, %s64
    %p66 = scmp.eq.s32.totalorder %s14, 0
    %p67 = por %p65, %p66
    %s68 = ssub.s32 %s8, %s15
    %p69 = scmp.eq.s32.totalorder %s68, 0
    %s71 = sadd.s32 %s70, 1
    %s72 = scalar_select %p69, %s70, %s71
    %p75 = pneg %p69
    %p76 = scmp.eq.s32.totalorder %s8, 1
    %p77 = por %p75, %p76
    %p78 = scmp.ne.s32.totalorder %s70, %s73
    %p79 = scmp.eq.s32.totalorder %s8, 0
    %p80 = por %p78, %p79
    %p81 = scmp.ne.s32.totalorder %s70, %s73
    %p82 = scmp.eq.s32.totalorder %s13, 1
    %p83 = por %p81, %p82
    %p84 = scmp.ne.s32.totalorder %s73, %s74
    %p85 = scmp.eq.s32.totalorder %s13, 0
    %p86 = por %p84, %p85
    %p87 = scmp.ne.s32.totalorder %s73, %s74
    %p88 = scmp.eq.s32.totalorder %s14, 1
    %p89 = por %p87, %p88
    %p91 = scmp.ne.s32.totalorder %s74, %s90
    %p92 = scmp.eq.s32.totalorder %s14, 0
    %p93 = por %p91, %p92
    %p94 = scmp.le.s32.totalorder 1, %s8
    %p95 = scmp.lt.s32.totalorder %s8, 3
    %p96 = pnand %p94, %p95
    %p97 = pneg %p96
    // Predicated region
    $region9: #{tpu_custom_call.1} parent=5 // pred_check
      _
    $region10: #{tpu_custom_call.1} parent=5 // pred_check_branch
      %99 = sbr.rel (%p96) target = $region12
    $region11: #{tpu_custom_call.1} parent=5 // pred_region
      %s100 = ssub.s32 %s8, 1
    $region12: #{tpu_custom_call.1} parent=5 // pred_fallthru
      _
    %p101 = scmp.lt.s32.totalorder %s8, 2
    // Predicated region
    $region13: #{tpu_custom_call.1} parent=5 // pred_check
      %p102 = pneg %p101
    $region14: #{tpu_custom_call.1} parent=5 // pred_check_branch
      %104 = sbr.rel (%p102) target = $region16
    $region15: #{tpu_custom_call.1} parent=5 // pred_region
      // Predicated region
      $region17: #{tpu_custom_call.1} parent=15 // pred_check
        %p105 = pneg %p28
      $region18: #{tpu_custom_call.1} parent=15 // pred_check_branch
        %107 = sbr.rel (%p105) target = $region20
      $region19: #{tpu_custom_call.1} parent=15 // pred_region
        %p108 = scmp.lt.s32.totalorder %s8, 1
        %s109 = scalar_select %p108, %s8, 1
        %s110 = smul.addr %s109, 8
        %s111 = scalar_lea.vmem %s0, %s110
      $region20: #{tpu_custom_call.1} parent=15 // pred_fallthru
        _
      // Predicated region
      $region21: #{tpu_custom_call.1} parent=15 // pred_check
        %p112 = pneg %p54
      $region22: #{tpu_custom_call.1} parent=15 // pred_check_branch
        %114 = sbr.rel (%p112) target = $region24
      $region23: #{tpu_custom_call.1} parent=15 // pred_region
        %p115 = scmp.lt.s32.totalorder %s8, 1
        %s116 = scalar_select %p115, %s8, 1
        %s117 = smul.addr %s116, 8
        %s118 = scalar_lea.vmem %s1, %s117
      $region24: #{tpu_custom_call.1} parent=15 // pred_fallthru
        _
    $region16: #{tpu_custom_call.1} parent=5 // pred_fallthru
      _
    %p119 = scmp.le.s32.totalorder 1, %s8
    %p120 = scmp.lt.s32.totalorder %s8, 3
    %p121 = pnand %p119, %p120
    %p122 = pneg %p121
    // Predicated region
    $region25: #{tpu_custom_call.1} parent=5 // pred_check
      _
    $region26: #{tpu_custom_call.1} parent=5 // pred_check_branch
      %124 = sbr.rel (%p121) target = $region28
    $region27: #{tpu_custom_call.1} parent=5 // pred_region
      %s125 = ssub.s32 %s8, 1
      %p126 = scmp.lt.s32.totalorder %s13, 1
      %s127 = scalar_select %p126, %s13, 1
      %s128 = smul.addr %s127, 8
      %s129 = scalar_lea.vmem %s0, %s128
      %p130 = pneg %p34
      %p131 = pneg %p31
      %p132 = scmp.lt.s32.totalorder %s13, 1
      %s133 = scalar_select %p132, %s13, 1
      %s134 = smul.addr %s133, 8
      %s135 = scalar_lea.vmem %s1, %s134
      %p136 = pneg %p60
      %p137 = pneg %p57
      %p138 = pneg %p86
      %p139 = pneg %p83
      %p140 = scmp.lt.s32.totalorder %s13, 1
      %s141 = scalar_select %p140, %s13, 1
      %s142 = smul.addr %s141, 8
      %s143 = scalar_lea.vmem %s2, %s142
      %p144 = scmp.lt.s32.totalorder %s13, 1
      %s145 = scalar_select %p144, %s13, 1
      %s146 = smul.addr %s145, 8
      %s147 = scalar_lea.vmem %s0, %s146
      %p148 = scmp.lt.s32.totalorder %s13, 1
      %s149 = scalar_select %p148, %s13, 1
      %s150 = smul.addr %s149, 8
      %s151 = scalar_lea.vmem %s1, %s150
      %p152 = scmp.lt.s32.totalorder %s13, 1
      %s153 = scalar_select %p152, %s13, 1
      %s154 = smul.addr %s153, 8
      %s155 = scalar_lea.vmem %s2, %s154
      %v156 = vld [vmem:[%s147] sm:$0xff]
      %v157 = vld [vmem:[%s151] sm:$0xff]
      %vm158 = vcmask 261120
      %v159 = vsel %vm158, %v156, -inf
      %160 = vmax.xlane.f32.xlu0 %v159
      %v161 = vpop.xlane.xlu0 %160
      %v162 = vsel %vm158, %v156, 0.0
      %163 = vadd.xlane.f32.xlu0 %v162
      %v164 = vpop.xlane.xlu0 %163
      %v165 = vsub.f32 %v156, %v161
      %v166 = vmul.f32 %v165, 1.442695
      %v167 = vpow.pop %v166
      %v168 = vsel %vm158, %v167, 0.0
      %169 = vadd.xlane.f32.xlu0 %v168
      %v170 = vpop.xlane.xlu0 %169
      %v171 = vlaneseq
      %v172 = vand.u32 %v171, 127
      %173 = vset.pattern.permute.xlu0 0
      %174 = vperm.xlu0 %173, %v157
      %v175 = vpop.permute.xlu0 %174
      %vm176 = vcmp.eq.s32.totalorder %v172, %v175
      %v177 = vsel %vm176, %v156, 0.0
      %v178 = vsel %vm158, %v177, 0.0
      %179 = vadd.xlane.f32.xlu0 %v178
      %v180 = vpop.xlane.xlu0 %179
      %v181 = vlog2.pop %v170
      %v182 = vmul.f32 %v181, 0.6931472
      %v183 = vadd.f32 %v161, %v182
      %v184 = vmul.f32 %v164, 0.003125
      %v185 = vsub.f32 %v183, %v184
      %v186 = vmul.f32 %v180, 0.9
      %v187 = vsub.f32 %v185, %v186
      %vm188 = vcmask 7168
      %189 = vst.msk [vmem:[%s155] sm:$0xff] %vm188, %v187
      %p190 = scmp.lt.s32.totalorder %s13, 1
      %s191 = scalar_select %p190, %s13, 1
      %s192 = smul.addr %s191, 8
      %s193 = scalar_lea.vmem %s2, %s192
      // Predicated region
      $region29: #{tpu_custom_call.1} parent=27 // pred_check
        %p194 = pneg %p83
      $region30: #{tpu_custom_call.1} parent=27 // pred_check_branch
        %196 = sbr.rel (%p194) target = $region32
      $region31: #{tpu_custom_call.1} parent=27 // pred_region
        _
      $region32: #{tpu_custom_call.1} parent=27 // pred_fallthru
        _
    $region28: #{tpu_custom_call.1} parent=5 // pred_fallthru
      _
    %p197 = scmp.le.s32.totalorder 2, %s8
    // Predicated region
    $region33: #{tpu_custom_call.1} parent=5 // pred_check
      %p198 = pneg %p197
    $region34: #{tpu_custom_call.1} parent=5 // pred_check_branch
      %200 = sbr.rel (%p198) target = $region36
    $region35: #{tpu_custom_call.1} parent=5 // pred_region
      %s201 = ssub.s32 %s8, 2
      // Predicated region
      $region37: #{tpu_custom_call.1} parent=35 // pred_check
        %p202 = pneg %p89
      $region38: #{tpu_custom_call.1} parent=35 // pred_check_branch
        %204 = sbr.rel (%p202) target = $region40
      $region39: #{tpu_custom_call.1} parent=35 // pred_region
        %p205 = scmp.lt.s32.totalorder %s14, 1
        %s206 = scalar_select %p205, %s14, 1
        %s207 = smul.addr %s206, 8
        %s208 = scalar_lea.vmem %s2, %s207
      $region40: #{tpu_custom_call.1} parent=35 // pred_fallthru
        _
    $region36: #{tpu_custom_call.1} parent=5 // pred_fallthru
      _
  $region6: #{tpu_custom_call.1} parent=0 // loop_footer
    %s12 = sadd.s32 1, %s8
  $region7: #{tpu_custom_call.1} parent=0 // loop_footer_branch
    %7 = sbr.rel target = $region3
  $region8: #{tpu_custom_call.1} parent=0 // loop_exit
    _

</llo_original>
